<compile_context>
chip_gen: v6e
topology: v6e:2x2x1
jax: 0.10.0
libtpu: 0.0.40
codegen_flags: <defaults>
</compile_context>

<pallas_src>
import functools
import math

import jax
import jax.numpy as jnp
from jax.experimental import pallas as pl
from jax.experimental.pallas import tpu as pltpu


def _dot_interaction_kernel(x_ref, y_ref, o_ref, *, scale):
    # x_ref: (bt, M, D), y_ref: (bt, N, D), o_ref: (bt, M, N)
    x = x_ref[...]
    y = y_ref[...]
    # Batched contraction over the feature axis (MXU), f32 accumulation.
    acc = jax.lax.dot_general(
        x, y,
        dimension_numbers=(((2,), (2,)), ((0,), (0,))),
        preferred_element_type=jnp.float32)                 # (bt, M, N)
    if scale is not None:
        acc = acc * jnp.float32(scale)
    o_ref[...] = acc.astype(o_ref.dtype)


def _pick_batch_tile(bz, M, N, D, itemsize, vmem_budget_bytes=8 * 1024 * 1024):
    """Batch-tile size: fill VMEM (double-buffered) without exceeding the
    default scoped VMEM on any generation (v5e 16 MiB, v6e 32 MiB, v7x 32 MiB)."""
    per_batch = (M * D + N * D + M * N) * itemsize          # one batch element's blocks
    bt = max(1, vmem_budget_bytes // (2 * per_batch))       # 2x for double buffering
    bt = min(bt, 1024)                                      # keep per-step DMA sane
    bt = min(bt, bz)
    if bz >= 2:
        # ensure >=2 grid steps so both v7x TensorCores get work
        bt = min(bt, pl.cdiv(bz, 2))
    return int(bt)


def dot_interaction(input1, input2, scale=False):
    """input1: (bz, M, D), input2: (bz, N, D) -> (bz, M, N) = bmm(X, Y^T) [* 1/sqrt(D)]."""
    bz, M, D = input1.shape
    bz2, N, D2 = input2.shape
    assert bz == bz2 and D == D2, "batch / feature dims must match"

    out_dtype = jnp.result_type(input1.dtype, input2.dtype)
    scale_val = (1.0 / math.sqrt(D)) if scale else None

    itemsize = max(jnp.dtype(input1.dtype).itemsize,
                   jnp.dtype(input2.dtype).itemsize,
                   jnp.dtype(out_dtype).itemsize)
    bt = _pick_batch_tile(bz, M, N, D, itemsize)

    # Pad batch to a multiple of the batch tile (padded rows are discarded).
    pad = (-bz) % bt
    if pad:
        input1 = jnp.pad(input1, ((0, pad), (0, 0), (0, 0)))
        input2 = jnp.pad(input2, ((0, pad), (0, 0), (0, 0)))
    bz_p = bz + pad

    out = pl.pallas_call(
        functools.partial(_dot_interaction_kernel, scale=scale_val),
        out_shape=jax.ShapeDtypeStruct((bz_p, M, N), out_dtype),
        grid=(bz_p // bt,),
        in_specs=[
            pl.BlockSpec((bt, M, D), lambda b: (b, 0, 0)),   # input1 tile
            pl.BlockSpec((bt, N, D), lambda b: (b, 0, 0)),   # input2 tile
        ],
        out_specs=pl.BlockSpec((bt, M, N), lambda b: (b, 0, 0)),
        compiler_params=pltpu.CompilerParams(
            dimension_semantics=("parallel",)),
    )(input1, input2)

    return out[:bz]


def _reference(input1, input2, scale=False):
    y = jnp.einsum("bmd,bnd->bmn", input1, input2,
                   preferred_element_type=jnp.float32).astype(
                       jnp.result_type(input1.dtype, input2.dtype))
    if scale:
        y = y * (1.0 / math.sqrt(input1.shape[-1]))
    return y


if __name__ == "__main__":
    bz, M, N, D = 2, 8, 16, 32
    key = jax.random.PRNGKey(0)
    k1, k2 = jax.random.split(key)
    x = jax.random.normal(k1, (bz, M, D), jnp.float32)
    y = jax.random.normal(k2, (bz, N, D), jnp.float32)

    # scaled variant (scale = 1/sqrt(feat_dim))
    out_scaled = jax.block_until_ready(dot_interaction(x, y, scale=True))
    ref_scaled = _reference(x, y, scale=True)
    assert out_scaled.shape == (bz, M, N)
    assert jnp.allclose(out_scaled, ref_scaled, atol=1e-5, rtol=1e-5)

    # unscaled variant
    out_plain = jax.block_until_ready(dot_interaction(x, y, scale=False))
    ref_plain = _reference(x, y, scale=False)
    assert jnp.allclose(out_plain, ref_plain, atol=1e-5, rtol=1e-5)

    print("KERNEL_OK")
</pallas_src>

<mosaic_0001>
module attributes {stable_mosaic.version = 11 : i64} {
  func.func @_dot_interaction_kernel(%arg0: i32, %arg1: memref<1x8x32xf32, #tpu.memory_space<vmem>>, %arg2: memref<1x16x32xf32, #tpu.memory_space<vmem>>, %arg3: memref<1x8x16xf32, #tpu.memory_space<vmem>>) attributes {dimension_semantics = [#tpu.dimension_semantics<parallel>], iteration_bounds = array<i64: 2>, scalar_prefetch = 0 : i64, scratch_operands = 0 : i64, tpu.core_type = #tpu.core_type<tc>, window_params = [{transform_indices = @transform_0, window_bounds = array<i64: 1, 8, 32>}, {transform_indices = @transform_1, window_bounds = array<i64: 1, 16, 32>}, {transform_indices = @transform_2, window_bounds = array<i64: 1, 8, 16>}]} {
    %c0 = arith.constant 0 : index
    %c0_0 = arith.constant 0 : index
    %c0_1 = arith.constant 0 : index
    %0 = vector.load %arg1[%c0, %c0_0, %c0_1] : memref<1x8x32xf32, #tpu.memory_space<vmem>>, vector<1x8x32xf32>
    %c0_2 = arith.constant 0 : index
    %c0_3 = arith.constant 0 : index
    %c0_4 = arith.constant 0 : index
    %1 = vector.load %arg2[%c0_2, %c0_3, %c0_4] : memref<1x16x32xf32, #tpu.memory_space<vmem>>, vector<1x16x32xf32>
    %cst = arith.constant dense<0.000000e+00> : vector<1x8x16xf32>
    %2 = tpu.matmul %0, %1, %cst {dimension_numbers = #tpu.dot_dimension_numbers<[2], [2], [1], [1], [0, 0, 0, 1, 1, 1], [0], [0]>} : vector<1x8x32xf32>, vector<1x16x32xf32>, vector<1x8x16xf32> -> vector<1x8x16xf32>
    %cst_5 = arith.constant 0.176776692 : f32
    %3 = vector.broadcast %cst_5 : f32 to vector<1x8x16xf32>
    %4 = arith.mulf %2, %3 : vector<1x8x16xf32>
    %c0_6 = arith.constant 0 : index
    %c0_7 = arith.constant 0 : index
    %c0_8 = arith.constant 0 : index
    %5 = vector.load %arg3[%c0_6, %c0_7, %c0_8] : memref<1x8x16xf32, #tpu.memory_space<vmem>>, vector<1x8x16xf32>
    tpu.vector_store %arg3[%c0_6, %c0_7, %c0_8], %4 {strides = array<i32>} : memref<1x8x16xf32, #tpu.memory_space<vmem>>, vector<1x8x16xf32>,
    return
  }
  func.func @transform_0(%arg0: i32) -> (i32, i32, i32) {
    %c0_i32 = arith.constant 0 : i32
    %c0_i32_0 = arith.constant 0 : i32
    %c0_i32_1 = arith.constant 0 : i32
    return %arg0, %c0_i32, %c0_i32_0 : i32, i32, i32
  }
  func.func @transform_1(%arg0: i32) -> (i32, i32, i32) {
    %c0_i32 = arith.constant 0 : i32
    %c0_i32_0 = arith.constant 0 : i32
    %c0_i32_1 = arith.constant 0 : i32
    return %arg0, %c0_i32, %c0_i32_0 : i32, i32, i32
  }
  func.func @transform_2(%arg0: i32) -> (i32, i32, i32) {
    %c0_i32 = arith.constant 0 : i32
    %c0_i32_0 = arith.constant 0 : i32
    %c0_i32_1 = arith.constant 0 : i32
    return %arg0, %c0_i32, %c0_i32_0 : i32, i32, i32
  }
}

</mosaic_0001>

<llo_original>
// kernel: tpu_custom_call.1
$region0: #{tpu_custom_call.1}
  #allocation0 [shape = 'u32[]', space=smem, size = 0x4, offset = 0x4, fixed_abs, tag = 'smem constant byte address 0x4 - core index']
  #allocation1 [shape = 'u32[144,128]{1,0:T(1,128)}', space=vmem, size = 0x12000, scoped, tag = 'internal scratch']
  %s0 = inlined_call_operand.hbm [shape: f32[2,8,32], index: 0, kind: input, shape index: {}]
  %s1 = inlined_call_operand.hbm [shape: f32[2,16,32], index: 1, kind: input, shape index: {}]
  %s2 = inlined_call_operand.hbm [shape: f32[2,8,16], index: 2, kind: output, shape index: {}]
  %s3 = sld [smem:[#allocation0]]
  $region49: #{tpu_custom_call.1} parent=0
    _
  %s5 = ssub.s32 1, %s3
  %s6 = scalar_select 0, %s5, %s3
  $region1: #{tpu_custom_call.1} parent=0
    #allocation2 [shape = 'u8[8192]{0}', space=vmem, size = 0x2000, scoped, tag = 'input window, operand 0']
    #allocation3 [shape = 's32[2]{0}', space=sflag, size = 0x8, scoped, tag = 'scoped memory for tpu_custom_call.1']
    #allocation4 [shape = 's32[2]{0}', space=sflag, size = 0x8, scoped, tag = 'scoped memory for tpu_custom_call.1']
    #allocation5 [shape = 'u8[16384]{0}', space=vmem, size = 0x4000, scoped, tag = 'input window, operand 1']
    #allocation6 [shape = 's32[2]{0}', space=sflag, size = 0x8, scoped, tag = 'scoped memory for tpu_custom_call.1']
    #allocation7 [shape = 'u8[8192]{0}', space=vmem, size = 0x2000, scoped, tag = 'output window, operand 0']
    %7 = vsyncpa [#allocation3], 0
    %s8 = scalar_lea.sflag [#allocation3], 1
    %9 = vsyncpa %s8, 0
    %10 = vsyncpa [#allocation6], 0
    %s11 = scalar_lea.sflag [#allocation6], 1
    %12 = vsyncpa %s11, 0
    %13 = vsyncpa [#allocation4], 0
    %s14 = scalar_lea.sflag [#allocation4], 1
    %15 = vsyncpa %s14, 0
    loop: start=0, step=1, limit=4
    $region2: #{tpu_custom_call.1} parent=1 // loop_pre_header
      _
    $region3: #{tpu_custom_call.1} parent=1 // loop_header
      %s17 = sphi 0, %s21
      %p18 = scmp.ge.s32.totalorder %s17, 4
      %s27 = sphi 0, %s29
      %s30 = sphi 0, %s27
      %s31 = sphi 0, %s30
      %s47 = sphi 0, %s31
      %s53 = sphi 0, %s55
      %s56 = sphi 0, %s53
      %s57 = sphi 0, %s56
      %s73 = sphi 0, %s57
      %s79 = sphi 0, %s81
      %s82 = sphi 0, %s79
      %s83 = sphi 0, %s82
      %s99 = sphi 0, %s83
    $region4: #{tpu_custom_call.1} parent=1 // loop_header_branch
      %20 = sbr.rel (%p18) target = $region8
    $region5: #{tpu_custom_call.1} parent=1 // loop_body
      %s22 = ssub.s32 %s17, 1
      %s23 = ssub.s32 %s17, 2
      %s24 = sadd.s32 %s17, 1
      %s25 = ssub.s32 %s17, %s24
      %p26 = scmp.eq.s32.totalorder %s25, 0
      %s28 = sadd.s32 %s27, 1
      %s29 = scalar_select %p26, %s27, %s28
      %p32 = pneg %p26
      %p33 = scmp.eq.s32.totalorder %s17, 1
      %p34 = por %p32, %p33
      %p35 = scmp.ne.s32.totalorder %s27, %s30
      %p36 = scmp.eq.s32.totalorder %s17, 0
      %p37 = por %p35, %p36
      %p38 = scmp.ne.s32.totalorder %s27, %s30
      %p39 = scmp.eq.s32.totalorder %s22, 1
      %p40 = por %p38, %p39
      %p41 = scmp.ne.s32.totalorder %s30, %s31
      %p42 = scmp.eq.s32.totalorder %s22, 0
      %p43 = por %p41, %p42
      %p44 = scmp.ne.s32.totalorder %s30, %s31
      %p45 = scmp.eq.s32.totalorder %s23, 1
      %p46 = por %p44, %p45
      %p48 = scmp.ne.s32.totalorder %s31, %s47
      %p49 = scmp.eq.s32.totalorder %s23, 0
      %p50 = por %p48, %p49
      %s51 = ssub.s32 %s17, %s24
      %p52 = scmp.eq.s32.totalorder %s51, 0
      %s54 = sadd.s32 %s53, 1
      %s55 = scalar_select %p52, %s53, %s54
      %p58 = pneg %p52
      %p59 = scmp.eq.s32.totalorder %s17, 1
      %p60 = por %p58, %p59
      %p61 = scmp.ne.s32.totalorder %s53, %s56
      %p62 = scmp.eq.s32.totalorder %s17, 0
      %p63 = por %p61, %p62
      %p64 = scmp.ne.s32.totalorder %s53, %s56
      %p65 = scmp.eq.s32.totalorder %s22, 1
      %p66 = por %p64, %p65
      %p67 = scmp.ne.s32.totalorder %s56, %s57
      %p68 = scmp.eq.s32.totalorder %s22, 0
      %p69 = por %p67, %p68
      %p70 = scmp.ne.s32.totalorder %s56, %s57
      %p71 = scmp.eq.s32.totalorder %s23, 1
      %p72 = por %p70, %p71
      %p74 = scmp.ne.s32.totalorder %s57, %s73
      %p75 = scmp.eq.s32.totalorder %s23, 0
      %p76 = por %p74, %p75
      %s77 = ssub.s32 %s17, %s24
      %p78 = scmp.eq.s32.totalorder %s77, 0
      %s80 = sadd.s32 %s79, 1
      %s81 = scalar_select %p78, %s79, %s80
      %p84 = pneg %p78
      %p85 = scmp.eq.s32.totalorder %s17, 1
      %p86 = por %p84, %p85
      %p87 = scmp.ne.s32.totalorder %s79, %s82
      %p88 = scmp.eq.s32.totalorder %s17, 0
      %p89 = por %p87, %p88
      %p90 = scmp.ne.s32.totalorder %s79, %s82
      %p91 = scmp.eq.s32.totalorder %s22, 1
      %p92 = por %p90, %p91
      %p93 = scmp.ne.s32.totalorder %s82, %s83
      %p94 = scmp.eq.s32.totalorder %s22, 0
      %p95 = por %p93, %p94
      %p96 = scmp.ne.s32.totalorder %s82, %s83
      %p97 = scmp.eq.s32.totalorder %s23, 1
      %p98 = por %p96, %p97
      %p100 = scmp.ne.s32.totalorder %s83, %s99
      %p101 = scmp.eq.s32.totalorder %s23, 0
      %p102 = por %p100, %p101
      %p103 = scmp.le.s32.totalorder 1, %s17
      %p104 = scmp.lt.s32.totalorder %s17, 3
      %p105 = pnand %p103, %p104
      %p106 = pneg %p105
      // Predicated region
      $region9: #{tpu_custom_call.1} parent=5 // pred_check
        _
      $region10: #{tpu_custom_call.1} parent=5 // pred_check_branch
        %108 = sbr.rel (%p105) target = $region12
      $region11: #{tpu_custom_call.1} parent=5 // pred_region
        %s109 = ssub.s32 %s17, 1
      $region12: #{tpu_custom_call.1} parent=5 // pred_fallthru
        _
      %p110 = scmp.lt.s32.totalorder %s17, 2
      // Predicated region
      $region13: #{tpu_custom_call.1} parent=5 // pred_check
        %p111 = pneg %p110
      $region14: #{tpu_custom_call.1} parent=5 // pred_check_branch
        %113 = sbr.rel (%p111) target = $region16
      $region15: #{tpu_custom_call.1} parent=5 // pred_region
        // Predicated region
        $region17: #{tpu_custom_call.1} parent=15 // pred_check
          %p114 = pneg %p37
        $region18: #{tpu_custom_call.1} parent=15 // pred_check_branch
          %116 = sbr.rel (%p114) target = $region20
        $region19: #{tpu_custom_call.1} parent=15 // pred_region
          %s117 = sand.u32 %s27, 1
          %s118 = scalar_lea.sflag [#allocation3], %s117
          %s119 = sand.u32 %s27, 1
          %s120 = smul.addr %s119, 8
          %s121 = scalar_lea.vmem [#allocation2], %s120
          %s123 = ssub.s32 128, 128
          %124 = vsyncadd %s118, %s123
          %s125 = smul.addr %s17, 128
          %s126 = scalar_lea.hbm %s0, %s125
          %s128 = sshll.u32 %s121, 4
          %s129 = int_to_ptr.vmem [resolvable:$true] %s128
          %131 = dma.hbm_to_vmem [thread:$0]  %s126, 128, %s129, %s118
        $region20: #{tpu_custom_call.1} parent=15 // pred_fallthru
          _
        // Predicated region
        $region21: #{tpu_custom_call.1} parent=15 // pred_check
          %p132 = pneg %p63
        $region22: #{tpu_custom_call.1} parent=15 // pred_check_branch
          %134 = sbr.rel (%p132) target = $region24
        $region23: #{tpu_custom_call.1} parent=15 // pred_region
          %s135 = sand.u32 %s53, 1
          %s136 = scalar_lea.sflag [#allocation6], %s135
          %s137 = sand.u32 %s53, 1
          %s138 = smul.addr %s137, 16
          %s139 = scalar_lea.vmem [#allocation5], %s138
          %s141 = ssub.s32 256, 256
          %142 = vsyncadd %s136, %s141
          %s143 = smul.addr %s17, 2
          %s144 = smul.addr %s143, 128
          %s145 = scalar_lea.hbm %s1, %s144
          %s146 = sshll.u32 %s139, 4
          %s147 = int_to_ptr.vmem [resolvable:$true] %s146
          %152 = dma.hbm_to_vmem [thread:$0]  %s145, 256, %s147, %s136, 128, 128, 8
        $region24: #{tpu_custom_call.1} parent=15 // pred_fallthru
          _
      $region16: #{tpu_custom_call.1} parent=5 // pred_fallthru
        _
      %p153 = scmp.le.s32.totalorder 1, %s17
      %p154 = scmp.lt.s32.totalorder %s17, 3
      %p155 = pnand %p153, %p154
      %p156 = pneg %p155
      // Predicated region
      $region25: #{tpu_custom_call.1} parent=5 // pred_check
        _
      $region26: #{tpu_custom_call.1} parent=5 // pred_check_branch
        %158 = sbr.rel (%p155) target = $region28
      $region27: #{tpu_custom_call.1} parent=5 // pred_region
        %s159 = ssub.s32 %s17, 1
        %s160 = sand.u32 %s30, 1
        %s161 = scalar_lea.sflag [#allocation3], %s160
        %s162 = sand.u32 %s30, 1
        %s163 = smul.addr %s162, 8
        %s164 = scalar_lea.vmem [#allocation2], %s163
        // Predicated region
        $region29: #{tpu_custom_call.1} parent=27 // pred_check
          %p165 = pneg %p43
        $region30: #{tpu_custom_call.1} parent=27 // pred_check_branch
          %167 = sbr.rel (%p165) target = $region32
        $region31: #{tpu_custom_call.1} parent=27 // pred_region
          %168 = dma.done %s161, 128
        $region32: #{tpu_custom_call.1} parent=27 // pred_fallthru
          _
        %s169 = sand.u32 %s56, 1
        %s170 = scalar_lea.sflag [#allocation6], %s169
        %s171 = sand.u32 %s56, 1
        %s172 = smul.addr %s171, 16
        %s173 = scalar_lea.vmem [#allocation5], %s172
        // Predicated region
        $region33: #{tpu_custom_call.1} parent=27 // pred_check
          %p174 = pneg %p69
        $region34: #{tpu_custom_call.1} parent=27 // pred_check_branch
          %176 = sbr.rel (%p174) target = $region36
        $region35: #{tpu_custom_call.1} parent=27 // pred_region
          %177 = dma.done %s170, 256
        $region36: #{tpu_custom_call.1} parent=27 // pred_fallthru
          _
        %s178 = sand.u32 %s30, 1
        %s179 = scalar_lea.sflag [#allocation3], %s178
        %s180 = sand.u32 %s30, 1
        %s181 = smul.addr %s180, 8
        %s182 = scalar_lea.vmem [#allocation2], %s181
        %p183 = pneg %p43
        %p184 = pneg %p40
        %s185 = sand.u32 %s56, 1
        %s186 = scalar_lea.sflag [#allocation6], %s185
        %s187 = sand.u32 %s56, 1
        %s188 = smul.addr %s187, 16
        %s189 = scalar_lea.vmem [#allocation5], %s188
        %p190 = pneg %p69
        %p191 = pneg %p66
        %p192 = pneg %p95
        %p193 = pneg %p92
        %s194 = sand.u32 %s82, 1
        %s195 = scalar_lea.sflag [#allocation4], %s194
        %s196 = sand.u32 %s82, 1
        %s197 = smul.addr %s196, 8
        %s198 = scalar_lea.vmem [#allocation7], %s197
        %v199 = vld [vmem:[%s164] sm:$0xff]
        %v200 = vld [vmem:[%s173] sm:$0xff]
        %v201 = vld [vmem:[%s173 + $0x8] sm:$0xff]
        %vm202 = vcmask 261120
        %v204 = vsel %vm202, %v199, 0
        %v207 = vsel %vm202, %v200, 0
        %v210 = vsel %vm202, %v201, 0
        %212 = vmatprep.subr.mxu0 0.0
        %213 = vmatpush1.xpose.msra.mxu0 0.0
        %214 = vmatprep.subr.mxu0 0.0
        %215 = vmatpush1.xpose.msra.mxu0 0.0
        %216 = vmatprep.subr.mxu0 0.0
        %217 = vmatpush1.xpose.msra.mxu0 0.0
        %218 = vmatprep.subr.mxu0 0.0
        %219 = vmatpush1.xpose.msra.mxu0 0.0
        %220 = vmatprep.subr.mxu0 0.0
        %221 = vmatpush1.xpose.msra.mxu0 0.0
        %222 = vmatprep.subr.mxu0 0.0
        %223 = vmatpush1.xpose.msra.mxu0 0.0
        %224 = vmatprep.subr.mxu0 0.0
        %225 = vmatpush1.xpose.msra.mxu0 0.0
        %226 = vmatprep.subr.mxu0 0.0
        %227 = vmatpush1.xpose.msra.mxu0 0.0
        %228 = vmatprep.subr.mxu0 0.0
        %229 = vmatpush1.xpose.msra.mxu0 0.0
        %230 = vmatprep.subr.mxu0 0.0
        %231 = vmatpush1.xpose.msra.mxu0 0.0
        %232 = vmatprep.subr.mxu0 0.0
        %233 = vmatpush1.xpose.msra.mxu0 0.0
        %234 = vmatprep.subr.mxu0 0.0
        %235 = vmatpush1.xpose.msra.mxu0 0.0
        %236 = vmatprep.subr.mxu0 0.0
        %237 = vmatpush1.xpose.msra.mxu0 0.0
        %238 = vmatprep.subr.mxu0 0.0
        %239 = vmatpush1.xpose.msra.mxu0 0.0
        %240 = vmatprep.subr.mxu0 0.0
        %241 = vmatpush1.xpose.msra.mxu0 %v210
        %242 = vmatprep.subr.mxu0 0.0
        %243 = vmatpush1.xpose.msra.mxu0 %v207
        %244 = vmatprep.subr.mxu0 0.0
        %245 = vmatpush2.xpose.msra.mxu0 0.0
        %246 = vmatprep.subr.mxu0 0.0
        %247 = vmatpush2.xpose.msra.mxu0 0.0
        %248 = vmatprep.subr.mxu0 0.0
        %249 = vmatpush2.xpose.msra.mxu0 0.0
        %250 = vmatprep.subr.mxu0 0.0
        %251 = vmatpush2.xpose.msra.mxu0 0.0
        %252 = vmatprep.subr.mxu0 0.0
        %253 = vmatpush2.xpose.msra.mxu0 0.0
        %254 = vmatprep.subr.mxu0 0.0
        %255 = vmatpush2.xpose.msra.mxu0 0.0
        %256 = vmatprep.subr.mxu0 0.0
        %257 = vmatpush2.xpose.msra.mxu0 0.0
        %258 = vmatprep.subr.mxu0 0.0
        %259 = vmatpush2.xpose.msra.mxu0 0.0
        %260 = vmatprep.subr.mxu0 0.0
        %261 = vmatpush2.xpose.msra.mxu0 0.0
        %262 = vmatprep.subr.mxu0 0.0
        %263 = vmatpush2.xpose.msra.mxu0 0.0
        %264 = vmatprep.subr.mxu0 0.0
        %265 = vmatpush2.xpose.msra.mxu0 0.0
        %266 = vmatprep.subr.mxu0 0.0
        %267 = vmatpush2.xpose.msra.mxu0 0.0
        %268 = vmatprep.subr.mxu0 0.0
        %269 = vmatpush2.xpose.msra.mxu0 0.0
        %270 = vmatprep.subr.mxu0 0.0
        %271 = vmatpush2.xpose.msra.mxu0 0.0
        %272 = vmatprep.subr.mxu0 0.0
        %273 = vmatpush2.xpose.msra.mxu0 0.0
        %274 = vmatprep.subr.mxu0 0.0
        %275 = vmatpush2.xpose.msra.mxu0 0.0
        %276 = vmatprep.mubr.f32.mxu0 0.0
        %277 = vmatmul.mubr.f32.gmra.mxu0 %v204
        %v278 = vpop.f32.mrf.mxu0
        %v279 = vadd.f32 0.0, %v278
        %v280 = vpop.f32.mrf.mxu0
        %281 = vdwg.mxu0
        %v282 = vmul.f32 %v279, 0.17677669
        %vm283 = vcmask 130048
        %284 = vst.msk [vmem:[%s198] sm:$0xff] %vm283, %v282
        %s285 = sand.u32 %s82, 1
        %s286 = scalar_lea.sflag [#allocation4], %s285
        %s287 = sand.u32 %s82, 1
        %s288 = smul.addr %s287, 8
        %s289 = scalar_lea.vmem [#allocation7], %s288
        // Predicated region
        $region37: #{tpu_custom_call.1} parent=27 // pred_check
          %p290 = pneg %p92
        $region38: #{tpu_custom_call.1} parent=27 // pred_check_branch
          %292 = sbr.rel (%p290) target = $region40
        $region39: #{tpu_custom_call.1} parent=27 // pred_region
          %s294 = ssub.s32 128, 128
          %295 = vsyncadd %s286, %s294
          %s296 = smul.addr %s22, 128
          %s297 = scalar_lea.hbm %s2, %s296
          %s299 = sshll.u32 %s289, 4
          %s300 = int_to_ptr.vmem [resolvable:$true] %s299
          %302 = dma.vmem_to_hbm [thread:$0]  %s300, 128, %s297, %s286
        $region40: #{tpu_custom_call.1} parent=27 // pred_fallthru
          _
      $region28: #{tpu_custom_call.1} parent=5 // pred_fallthru
        _
      %p303 = scmp.le.s32.totalorder 2, %s17
      // Predicated region
      $region41: #{tpu_custom_call.1} parent=5 // pred_check
        %p304 = pneg %p303
      $region42: #{tpu_custom_call.1} parent=5 // pred_check_branch
        %306 = sbr.rel (%p304) target = $region44
      $region43: #{tpu_custom_call.1} parent=5 // pred_region
        %s307 = ssub.s32 %s17, 2
        // Predicated region
        $region45: #{tpu_custom_call.1} parent=43 // pred_check
          %p308 = pneg %p98
        $region46: #{tpu_custom_call.1} parent=43 // pred_check_branch
          %310 = sbr.rel (%p308) target = $region48
        $region47: #{tpu_custom_call.1} parent=43 // pred_region
          %s311 = sand.u32 %s83, 1
          %s312 = scalar_lea.sflag [#allocation4], %s311
          %s313 = sand.u32 %s83, 1
          %s314 = smul.addr %s313, 8
          %s315 = scalar_lea.vmem [#allocation7], %s314
          %316 = dma.done %s312, 128
        $region48: #{tpu_custom_call.1} parent=43 // pred_fallthru
          _
      $region44: #{tpu_custom_call.1} parent=5 // pred_fallthru
        _
    $region6: #{tpu_custom_call.1} parent=1 // loop_footer
      %s21 = sadd.s32 1, %s17
    $region7: #{tpu_custom_call.1} parent=1 // loop_footer_branch
      %16 = sbr.rel target = $region3
    $region8: #{tpu_custom_call.1} parent=1 // loop_exit
      _
    %317 = vsyncpa [#allocation3], 1
    %s318 = scalar_lea.sflag [#allocation3], 1
    %319 = vsyncpa %s318, 1
    %320 = vsyncpa [#allocation6], 1
    %s321 = scalar_lea.sflag [#allocation6], 1
    %322 = vsyncpa %s321, 1
    %323 = vsyncpa [#allocation4], 1
    %s324 = scalar_lea.sflag [#allocation4], 1
    %325 = vsyncpa %s324, 1

</llo_original>
